<compile_context>
chip_gen: v7x
topology: tpu7x:2x2x1
jax: 0.10.0
libtpu: 0.0.40
codegen_flags: <defaults>
</compile_context>

<pallas_src>
import jax
import jax.numpy as jnp
from jax import lax
from jax.experimental import pallas as pl
from jax.experimental.pallas import tpu as pltpu


def _round_up(x, m):
    return ((x + m - 1) // m) * m


def _make_ce_kernel(n_rows, vocab, tm, tv):
    mask_rows = (n_rows % tm) != 0      # static: tail row block overhangs
    mask_cols = (vocab % tv) != 0       # static: tail vocab block overhangs

    def kernel(logit_ref, tgt_ref, loss_ref, m_scr, l_scr, p_scr):
        # logit_ref: (tm, tv) native dtype ; tgt_ref: (tm, 1) i32 (-1 => masked row)
        # loss_ref : (1, 8, 128) f32 partial-sum block for this row tile
        # m/l/p_scr: (tm, 1) f32 running max / running sum(exp) / picked target logit
        i = pl.program_id(0)
        j = pl.program_id(1)
        last_j = pl.num_programs(1) - 1

        @pl.when(j == 0)
        def _():
            m_scr[...] = jnp.full_like(m_scr, -jnp.inf)
            l_scr[...] = jnp.zeros_like(l_scr)
            p_scr[...] = jnp.zeros_like(p_scr)

        x = logit_ref[...].astype(jnp.float32)                 # (tm, tv)
        tgt = tgt_ref[...]                                     # (tm, 1) i32
        # Cheap (1, tv) local column index (no per-step full-tile iota/add).
        local_col = lax.broadcasted_iota(jnp.int32, (1, tv), 1)

        def lse_update(x_blk):
            blk_max = jnp.max(x_blk, axis=-1, keepdims=True)   # (tm, 1)
            m_prev = m_scr[...]
            m_new = jnp.maximum(m_prev, blk_max)
            l_scr[...] = (l_scr[...] * jnp.exp(m_prev - m_new)
                          + jnp.sum(jnp.exp(x_blk - m_new), axis=-1, keepdims=True))
            m_scr[...] = m_new

        if mask_cols:
            # Interior vocab blocks: no masking work at all.
            @pl.when(j < last_j)
            def _():
                lse_update(x)

            # Only the final (overhanging) vocab block applies the tail mask,
            # via a (1, tv) broadcast compare.
            @pl.when(j == last_j)
            def _():
                col_ok = local_col < (vocab - j * tv)          # (1, tv)
                lse_update(jnp.where(col_ok, x, jnp.float32(-1e30)))
        else:
            lse_update(x)

        # Gather the logit at the target column via compare-select against the
        # per-row shifted target. Valid targets (< vocab) never land on a tail
        # column; masked rows use -1 and never match.
        shifted_tgt = tgt - j * tv                             # (tm, 1)
        p_scr[...] += jnp.sum(jnp.where(local_col == shifted_tgt, x, 0.0),
                              axis=-1, keepdims=True)

        @pl.when(j == last_j)
        def _():
            valid = tgt >= 0
            if mask_rows:
                row = i * tm + lax.broadcasted_iota(jnp.int32, (tm, 1), 0)
                valid = valid & (row < n_rows)
            lse = m_scr[...] + jnp.log(l_scr[...])
            # Keep the select (NOT multiply-by-mask): garbage tail rows may hold
            # inf/NaN and an elementwise select does not propagate them.
            per_tok = jnp.where(valid, lse - p_scr[...], 0.0)
            loss_ref[...] = jnp.broadcast_to(jnp.sum(per_tok), loss_ref.shape)

    return kernel


def cross_entropy_loss(logit, cap, cap_len, *, tm_max=256, tv_max=4096):
    """Pallas equivalent of Cross_Entropy.forward(logit, cap, cap_len)."""
    B, Tm1, V = logit.shape
    target = cap[:, 1:].astype(jnp.int32)                     # (B, T-1)
    lens = (cap_len - 1).astype(jnp.int32)                    # (B,)

    # Validity mask (what pack_padded_sequence keeps): t < lens[b].
    t_ids = jnp.arange(Tm1, dtype=jnp.int32)[None, :]
    valid = t_ids < lens[:, None]                             # (B, T-1) bool
    tgt_masked = jnp.where(valid, target, -1)                 # -1 marks masked tokens

    N = B * Tm1
    itemsize = jnp.dtype(logit.dtype).itemsize
    pack = max(1, 4 // itemsize) * 8                          # sublane packing: 8 f32 / 16 bf16 / 32 i8

    # Vocab tile: full V if it fits, else a multiple of 128 (lane constraint).
    tv_max = max(128, (tv_max // 128) * 128)
    tv = V if V <= tv_max else tv_max

    # Row tile: as large as allowed, but capped at ceil(N/2) so the "parallel"
    # row axis has >=2 blocks whenever N allows (v7x megacore sharding).
    tm_cap = _round_up(max(1, pl.cdiv(N, 2)), pack)
    tm = _round_up(min(tm_max, tm_cap, _round_up(N, pack)), pack)
    n_rb = pl.cdiv(N, tm)
    n_vb = pl.cdiv(V, tv)

    logits_flat = logit.reshape(N, V)                         # free reshape, no astype/pad
    tgt_flat = tgt_masked.reshape(N, 1)

    # Token count is trivial scalar math -> plain JAX.
    # TODO(synk): count == 0 (all tokens masked) yields NaN, matching PyTorch on an empty pack.
    count = jnp.sum(valid).astype(jnp.float32)

    # VMEM budget: double-buffered logit tiles + ~2 full-tile f32 temporaries
    # (cast / exp intermediates) + small accumulators/outputs + 1 MiB margin.
    vmem_bytes = (2 * tm * tv * itemsize + 2 * tm * tv * 4
                  + 8 * tm * 4 + 2 * 8 * 128 * 4 + (1 << 20))
    vmem_bytes = int(min(max(vmem_bytes, 16 << 20), 56 << 20))

    loss_part = pl.pallas_call(
        _make_ce_kernel(N, V, tm, tv),
        out_shape=jax.ShapeDtypeStruct((n_rb, 8, 128), jnp.float32),
        grid_spec=pltpu.PrefetchScalarGridSpec(
            num_scalar_prefetch=0,
            grid=(n_rb, n_vb),
            in_specs=[
                pl.BlockSpec((tm, tv), lambda i, j: (i, j)),
                pl.BlockSpec((tm, 1), lambda i, j: (i, 0)),
            ],
            out_specs=pl.BlockSpec((1, 8, 128), lambda i, j: (i, 0, 0)),
            scratch_shapes=[
                pltpu.VMEM((tm, 1), jnp.float32),   # running max
                pltpu.VMEM((tm, 1), jnp.float32),   # running sum(exp)
                pltpu.VMEM((tm, 1), jnp.float32),   # picked target logit
            ],
        ),
        compiler_params=pltpu.CompilerParams(
            dimension_semantics=("parallel", "arbitrary"),
            vmem_limit_bytes=vmem_bytes,
        ),
    )(logits_flat, tgt_flat)

    loss_sum = jnp.sum(loss_part[:, 0, 0])
    return loss_sum / count


def _reference_loss(logit, cap, cap_len):
    # Pure-JAX reference (masked mean CE).
    target = cap[:, 1:]
    lens = cap_len - 1
    B, Tm1, V = logit.shape
    mask = (jnp.arange(Tm1)[None, :] < lens[:, None]).astype(jnp.float32)
    logp = jax.nn.log_softmax(logit.astype(jnp.float32), axis=-1)
    picked = jnp.take_along_axis(logp, target[..., None].astype(jnp.int32), axis=-1)[..., 0]
    return jnp.sum(-picked * mask) / jnp.sum(mask)


if __name__ == "__main__":
    key = jax.random.PRNGKey(0)

    # --- Test 1: small, single vocab block, even row blocks ---
    B, T, V = 2, 9, 128
    k1, k2 = jax.random.split(key)
    logit = jax.random.normal(k1, (B, T - 1, V), dtype=jnp.float32)
    cap = jax.random.randint(k2, (B, T), 0, V, dtype=jnp.int32)
    cap_len = jnp.array([9, 6], dtype=jnp.int32)
    loss = jax.block_until_ready(cross_entropy_loss(logit, cap, cap_len))
    ref = _reference_loss(logit, cap, cap_len)
    assert jnp.allclose(loss, ref, rtol=1e-5, atol=1e-5), (loss, ref)

    # --- Test 2: multi vocab blocks with a tail block + tail row block ---
    B, T, V = 3, 6, 320
    k3, k4 = jax.random.split(k1)
    logit2 = jax.random.normal(k3, (B, T - 1, V), dtype=jnp.float32)
    cap2 = jax.random.randint(k4, (B, T), 0, V, dtype=jnp.int32)
    cap_len2 = jnp.array([6, 4, 2], dtype=jnp.int32)
    loss2 = jax.block_until_ready(
        cross_entropy_loss(logit2, cap2, cap_len2, tm_max=8, tv_max=128))
    ref2 = _reference_loss(logit2, cap2, cap_len2)
    assert jnp.allclose(loss2, ref2, rtol=1e-5, atol=1e-5), (loss2, ref2)

    # --- Test 3: bf16 logits (halved HBM traffic; tm rounds to 16) ---
    B, T, V = 2, 9, 320
    k5, k6 = jax.random.split(k2)
    logit3 = jax.random.normal(k5, (B, T - 1, V), dtype=jnp.bfloat16)
    cap3 = jax.random.randint(k6, (B, T), 0, V, dtype=jnp.int32)
    cap_len3 = jnp.array([9, 5], dtype=jnp.int32)
    loss3 = jax.block_until_ready(
        cross_entropy_loss(logit3, cap3, cap_len3, tv_max=128))
    ref3 = _reference_loss(logit3, cap3, cap_len3)
    assert jnp.allclose(loss3, ref3, rtol=1e-3, atol=1e-3), (loss3, ref3)

    print("KERNEL_OK")
</pallas_src>

<mosaic_0001>
module attributes {stable_mosaic.version = 11 : i64} {
  func.func @kernel(%arg0: i32, %arg1: i32, %arg2: memref<8x128xf32, #tpu.memory_space<vmem>>, %arg3: memref<8x1xi32, #tpu.memory_space<vmem>>, %arg4: memref<1x8x128xf32, #tpu.memory_space<vmem>>, %arg5: memref<8x1xf32, #tpu.memory_space<vmem>>, %arg6: memref<8x1xf32, #tpu.memory_space<vmem>>, %arg7: memref<8x1xf32, #tpu.memory_space<vmem>>) attributes {dimension_semantics = [#tpu.dimension_semantics<parallel>, #tpu.dimension_semantics<arbitrary>], iteration_bounds = array<i64: 2, 1>, scalar_prefetch = 0 : i64, scratch_operands = 3 : i64, tpu.core_type = #tpu.core_type<tc>, window_params = [{transform_indices = @transform_0, window_bounds = array<i64: 8, 128>}, {transform_indices = @transform_1, window_bounds = array<i64: 8, 1>}, {transform_indices = @transform_2, window_bounds = array<i64: 1, 8, 128>}]} {
    %c0_i32 = arith.constant 0 : i32
    %0 = arith.cmpi eq, %arg1, %c0_i32 : i32
    %1 = arith.extui %0 : i1 to i32
    %c0_i32_0 = arith.constant 0 : i32
    %2 = arith.cmpi ne, %1, %c0_i32_0 : i32
    scf.if %2 {
      %cst_21 = arith.constant 0xFF800000 : f32
      %38 = vector.broadcast %cst_21 : f32 to vector<8x1xf32>
      %c0_22 = arith.constant 0 : index
      %c0_23 = arith.constant 0 : index
      %39 = vector.load %arg5[%c0_22, %c0_23] : memref<8x1xf32, #tpu.memory_space<vmem>>, vector<8x1xf32>
      tpu.vector_store %arg5[%c0_22, %c0_23], %38 {strides = array<i32>} : memref<8x1xf32, #tpu.memory_space<vmem>>, vector<8x1xf32>,
      %cst_24 = arith.constant 0.000000e+00 : f32
      %40 = vector.broadcast %cst_24 : f32 to vector<8x1xf32>
      %c0_25 = arith.constant 0 : index
      %c0_26 = arith.constant 0 : index
      %41 = vector.load %arg6[%c0_25, %c0_26] : memref<8x1xf32, #tpu.memory_space<vmem>>, vector<8x1xf32>
      tpu.vector_store %arg6[%c0_25, %c0_26], %40 {strides = array<i32>} : memref<8x1xf32, #tpu.memory_space<vmem>>, vector<8x1xf32>,
      %cst_27 = arith.constant 0.000000e+00 : f32
      %42 = vector.broadcast %cst_27 : f32 to vector<8x1xf32>
      %c0_28 = arith.constant 0 : index
      %c0_29 = arith.constant 0 : index
      %43 = vector.load %arg7[%c0_28, %c0_29] : memref<8x1xf32, #tpu.memory_space<vmem>>, vector<8x1xf32>
      tpu.vector_store %arg7[%c0_28, %c0_29], %42 {strides = array<i32>} : memref<8x1xf32, #tpu.memory_space<vmem>>, vector<8x1xf32>,
    } else {
    }
    %c0 = arith.constant 0 : index
    %c0_1 = arith.constant 0 : index
    %3 = vector.load %arg2[%c0, %c0_1] : memref<8x128xf32, #tpu.memory_space<vmem>>, vector<8x128xf32>
    %c0_2 = arith.constant 0 : index
    %c0_3 = arith.constant 0 : index
    %4 = vector.load %arg3[%c0_2, %c0_3] : memref<8x1xi32, #tpu.memory_space<vmem>>, vector<8x1xi32>
    %5 = tpu.iota {dimensions = array<i32: 1>} : vector<1x128xi32>
    %cst = arith.constant dense<0xFF800000> : vector<8xf32>
    %6 = vector.multi_reduction <maximumf>, %3, %cst [1] : vector<8x128xf32> to vector<8xf32>
    %7 = vector.shape_cast %6 : vector<8xf32> to vector<8x1xf32>
    %c0_4 = arith.constant 0 : index
    %c0_5 = arith.constant 0 : index
    %8 = vector.load %arg5[%c0_4, %c0_5] : memref<8x1xf32, #tpu.memory_space<vmem>>, vector<8x1xf32>
    %9 = arith.maximumf %8, %7 : vector<8x1xf32>
    %c0_6 = arith.constant 0 : index
    %c0_7 = arith.constant 0 : index
    %10 = vector.load %arg6[%c0_6, %c0_7] : memref<8x1xf32, #tpu.memory_space<vmem>>, vector<8x1xf32>
    %11 = arith.subf %8, %9 : vector<8x1xf32>
    %12 = math.exp %11 : vector<8x1xf32>
    %13 = arith.mulf %10, %12 : vector<8x1xf32>
    %14 = vector.broadcast %9 : vector<8x1xf32> to vector<8x128xf32>
    %15 = arith.subf %3, %14 : vector<8x128xf32>
    %16 = math.exp %15 : vector<8x128xf32>
    %cst_8 = arith.constant dense<0.000000e+00> : vector<8xf32>
    %17 = vector.multi_reduction <add>, %16, %cst_8 [1] : vector<8x128xf32> to vector<8xf32>
    %18 = vector.shape_cast %17 : vector<8xf32> to vector<8x1xf32>
    %19 = arith.addf %13, %18 : vector<8x1xf32>
    %c0_9 = arith.constant 0 : index
    %c0_10 = arith.constant 0 : index
    %20 = vector.load %arg6[%c0_9, %c0_10] : memref<8x1xf32, #tpu.memory_space<vmem>>, vector<8x1xf32>
    tpu.vector_store %arg6[%c0_9, %c0_10], %19 {strides = array<i32>} : memref<8x1xf32, #tpu.memory_space<vmem>>, vector<8x1xf32>,
    %c0_11 = arith.constant 0 : index
    %c0_12 = arith.constant 0 : index
    %21 = vector.load %arg5[%c0_11, %c0_12] : memref<8x1xf32, #tpu.memory_space<vmem>>, vector<8x1xf32>
    tpu.vector_store %arg5[%c0_11, %c0_12], %9 {strides = array<i32>} : memref<8x1xf32, #tpu.memory_space<vmem>>, vector<8x1xf32>,
    %c128_i32 = arith.constant 128 : i32
    %22 = arith.muli %arg1, %c128_i32 : i32
    %23 = vector.broadcast %22 : i32 to vector<8x1xi32>
    %24 = arith.subi %4, %23 : vector<8x1xi32>
    %c0_13 = arith.constant 0 : index
    %c0_14 = arith.constant 0 : index
    %25 = vector.load %arg7[%c0_13, %c0_14] : memref<8x1xf32, #tpu.memory_space<vmem>>, vector<8x1xf32>
    %26 = vector.broadcast %5 : vector<1x128xi32> to vector<8x128xi32>
    %27 = vector.broadcast %24 : vector<8x1xi32> to vector<8x128xi32>
    %28 = arith.cmpi eq, %26, %27 : vector<8x128xi32>
    %cst_15 = arith.constant 0.000000e+00 : f32
    %29 = vector.broadcast %cst_15 : f32 to vector<8x128xf32>
    %30 = arith.select %28, %3, %29 : vector<8x128xi1>, vector<8x128xf32>
    %cst_16 = arith.constant dense<0.000000e+00> : vector<8xf32>
    %31 = vector.multi_reduction <add>, %30, %cst_16 [1] : vector<8x128xf32> to vector<8xf32>
    %32 = vector.shape_cast %31 : vector<8xf32> to vector<8x1xf32>
    %33 = arith.addf %25, %32 : vector<8x1xf32>
    %c0_17 = arith.constant 0 : index
    %c0_18 = arith.constant 0 : index
    %34 = vector.load %arg7[%c0_17, %c0_18] : memref<8x1xf32, #tpu.memory_space<vmem>>, vector<8x1xf32>
    tpu.vector_store %arg7[%c0_17, %c0_18], %33 {strides = array<i32>} : memref<8x1xf32, #tpu.memory_space<vmem>>, vector<8x1xf32>,
    %c0_i32_19 = arith.constant 0 : i32
    %35 = arith.cmpi eq, %arg1, %c0_i32_19 : i32
    %36 = arith.extui %35 : i1 to i32
    %c0_i32_20 = arith.constant 0 : i32
    %37 = arith.cmpi ne, %36, %c0_i32_20 : i32
    scf.if %37 {
      %c0_i32_21 = arith.constant 0 : i32
      %38 = vector.broadcast %c0_i32_21 : i32 to vector<8x1xi32>
      %39 = arith.cmpi sge, %4, %38 : vector<8x1xi32>
      %c0_22 = arith.constant 0 : index
      %c0_23 = arith.constant 0 : index
      %40 = vector.load %arg5[%c0_22, %c0_23] : memref<8x1xf32, #tpu.memory_space<vmem>>, vector<8x1xf32>
      %c0_24 = arith.constant 0 : index
      %c0_25 = arith.constant 0 : index
      %41 = vector.load %arg6[%c0_24, %c0_25] : memref<8x1xf32, #tpu.memory_space<vmem>>, vector<8x1xf32>
      %42 = math.log %41 : vector<8x1xf32>
      %43 = arith.addf %40, %42 : vector<8x1xf32>
      %c0_26 = arith.constant 0 : index
      %c0_27 = arith.constant 0 : index
      %44 = vector.load %arg7[%c0_26, %c0_27] : memref<8x1xf32, #tpu.memory_space<vmem>>, vector<8x1xf32>
      %45 = arith.subf %43, %44 : vector<8x1xf32>
      %cst_28 = arith.constant 0.000000e+00 : f32
      %46 = vector.broadcast %cst_28 : f32 to vector<8x1xf32>
      %47 = arith.select %39, %45, %46 : vector<8x1xi1>, vector<8x1xf32>
      %48 = vector.shape_cast %47 : vector<8x1xf32> to vector<1x8x1xf32>
      %cst_29 = arith.constant dense<0.000000e+00> : vector<1xf32>
      %49 = vector.multi_reduction <add>, %48, %cst_29 [1, 2] : vector<1x8x1xf32> to vector<1xf32>
      %50 = vector.shape_cast %49 : vector<1xf32> to vector<1x1x1xf32>
      %51 = vector.extract %50[0, 0, 0] : f32 from vector<1x1x1xf32>
      %52 = vector.broadcast %51 : f32 to vector<1x8x128xf32>
      %c0_30 = arith.constant 0 : index
      %c0_31 = arith.constant 0 : index
      %c0_32 = arith.constant 0 : index
      %53 = vector.load %arg4[%c0_30, %c0_31, %c0_32] : memref<1x8x128xf32, #tpu.memory_space<vmem>>, vector<1x8x128xf32>
      tpu.vector_store %arg4[%c0_30, %c0_31, %c0_32], %52 {strides = array<i32>} : memref<1x8x128xf32, #tpu.memory_space<vmem>>, vector<1x8x128xf32>,
    } else {
    }
    return
  }
  func.func @transform_0(%arg0: i32, %arg1: i32) -> (i32, i32) {
    %c0_i32 = arith.constant 0 : i32
    return %arg0, %arg1 : i32, i32
  }
  func.func @transform_1(%arg0: i32, %arg1: i32) -> (i32, i32) {
    %c0_i32 = arith.constant 0 : i32
    %c0_i32_0 = arith.constant 0 : i32
    return %arg0, %c0_i32 : i32, i32
  }
  func.func @transform_2(%arg0: i32, %arg1: i32) -> (i32, i32, i32) {
    %c0_i32 = arith.constant 0 : i32
    %c0_i32_0 = arith.constant 0 : i32
    %c0_i32_1 = arith.constant 0 : i32
    return %arg0, %c0_i32, %c0_i32_0 : i32, i32, i32
  }
}

</mosaic_0001>

<llo_original>
// kernel: tpu_custom_call.1
$region0: #{tpu_custom_call.1}
  #allocation0 [shape = 'u32[]', space=smem, size = 0x4, offset = 0x4, fixed_abs, tag = 'smem constant byte address 0x4 - core index']
  #allocation1 [shape = 'u32[144,128]{1,0:T(1,128)}', space=vmem, size = 0x12000, scoped, tag = 'internal scratch']
  #allocation2 [shape = 'f32[8,1]{1,0:T(8,128)}', space=vmem, size = 0x1000, scoped, tag = 'scratch operand']
  #allocation3 [shape = 'f32[8,1]{1,0:T(8,128)}', space=vmem, size = 0x1000, scoped, tag = 'scratch operand']
  #allocation4 [shape = 'f32[8,1]{1,0:T(8,128)}', space=vmem, size = 0x1000, scoped, tag = 'scratch operand']
  %s0 = inlined_call_operand.vmem [shape: f32[16,128], index: 0, kind: input, shape index: {}]
  %s1 = inlined_call_operand.vmem [shape: s32[16,1], index: 1, kind: input, shape index: {}]
  %s2 = inlined_call_operand.hbm [shape: f32[2,8,128], index: 2, kind: output, shape index: {}]
  %s3 = sld [smem:[#allocation0]]
  $region49: #{tpu_custom_call.1} parent=0
    _
  %s5 = ssub.s32 1, %s3
  %s6 = scalar_select 0, %s5, %s3
  $region1: #{tpu_custom_call.1} parent=0
    #allocation5 [shape = 'u8[8192]{0}', space=vmem, size = 0x2000, scoped, tag = 'output window, operand 0']
    #allocation6 [shape = 's32[2]{0}', space=sflag, size = 0x8, scoped, tag = 'scoped memory for tpu_custom_call.1']
    %7 = vsyncpa [#allocation6], 0
    %s8 = scalar_lea.sflag [#allocation6], 1
    %9 = vsyncpa %s8, 0
    loop: start=0, step=1, limit=4
    $region2: #{tpu_custom_call.1} parent=1 // loop_pre_header
      _
    $region3: #{tpu_custom_call.1} parent=1 // loop_header
      %s11 = sphi 0, %s15
      %p12 = scmp.ge.s32.totalorder %s11, 4
      %s18 = sphi 0, %s30
      %s19 = sphi 0, %s26
      %s20 = sphi 0, %s18
      %s21 = sphi 0, %s19
      %s22 = sphi 0, %s20
      %s23 = sphi 0, %s21
      %s35 = sphi 0, %s37
      %s38 = sphi 0, %s35
      %s39 = sphi 0, %s38
      %s55 = sphi 0, %s39
      %s61 = sphi 0, %s63
      %s64 = sphi 0, %s61
      %s65 = sphi 0, %s64
      %s81 = sphi 0, %s65
      %s87 = sphi 0, %s89
      %s90 = sphi 0, %s87
      %s91 = sphi 0, %s90
      %s107 = sphi 0, %s91
    $region4: #{tpu_custom_call.1} parent=1 // loop_header_branch
      %14 = sbr.rel (%p12) target = $region8
    $region5: #{tpu_custom_call.1} parent=1 // loop_body
      %s16 = ssub.s32 %s11, 1
      %s17 = ssub.s32 %s11, 2
      %s24 = sadd.s32 1, %s19
      %p25 = scmp.ge.s32.totalorder %s24, 1
      %s26 = scalar_select %p25, 0, %s24
      %s27 = sadd.s32 1, %s18
      %s28 = scalar_select %p25, %s27, %s18
      %p29 = scmp.ge.s32.totalorder %s28, 2
      %s30 = scalar_select %p29, 0, %s28
      %s31 = ssub.s32 %s18, %s30
      %s32 = ssub.s32 %s19, %s26
      %s33 = sor.u32 %s31, %s32
      %p34 = scmp.eq.s32.totalorder %s33, 0
      %s36 = sadd.s32 %s35, 1
      %s37 = scalar_select %p34, %s35, %s36
      %p40 = pneg %p34
      %p41 = scmp.eq.s32.totalorder %s11, 1
      %p42 = por %p40, %p41
      %p43 = scmp.ne.s32.totalorder %s35, %s38
      %p44 = scmp.eq.s32.totalorder %s11, 0
      %p45 = por %p43, %p44
      %p46 = scmp.ne.s32.totalorder %s35, %s38
      %p47 = scmp.eq.s32.totalorder %s16, 1
      %p48 = por %p46, %p47
      %p49 = scmp.ne.s32.totalorder %s38, %s39
      %p50 = scmp.eq.s32.totalorder %s16, 0
      %p51 = por %p49, %p50
      %p52 = scmp.ne.s32.totalorder %s38, %s39
      %p53 = scmp.eq.s32.totalorder %s17, 1
      %p54 = por %p52, %p53
      %p56 = scmp.ne.s32.totalorder %s39, %s55
      %p57 = scmp.eq.s32.totalorder %s17, 0
      %p58 = por %p56, %p57
      %s59 = ssub.s32 %s18, %s30
      %p60 = scmp.eq.s32.totalorder %s59, 0
      %s62 = sadd.s32 %s61, 1
      %s63 = scalar_select %p60, %s61, %s62
      %p66 = pneg %p60
      %p67 = scmp.eq.s32.totalorder %s11, 1
      %p68 = por %p66, %p67
      %p69 = scmp.ne.s32.totalorder %s61, %s64
      %p70 = scmp.eq.s32.totalorder %s11, 0
      %p71 = por %p69, %p70
      %p72 = scmp.ne.s32.totalorder %s61, %s64
      %p73 = scmp.eq.s32.totalorder %s16, 1
      %p74 = por %p72, %p73
      %p75 = scmp.ne.s32.totalorder %s64, %s65
      %p76 = scmp.eq.s32.totalorder %s16, 0
      %p77 = por %p75, %p76
      %p78 = scmp.ne.s32.totalorder %s64, %s65
      %p79 = scmp.eq.s32.totalorder %s17, 1
      %p80 = por %p78, %p79
      %p82 = scmp.ne.s32.totalorder %s65, %s81
      %p83 = scmp.eq.s32.totalorder %s17, 0
      %p84 = por %p82, %p83
      %s85 = ssub.s32 %s18, %s30
      %p86 = scmp.eq.s32.totalorder %s85, 0
      %s88 = sadd.s32 %s87, 1
      %s89 = scalar_select %p86, %s87, %s88
      %p92 = pneg %p86
      %p93 = scmp.eq.s32.totalorder %s11, 1
      %p94 = por %p92, %p93
      %p95 = scmp.ne.s32.totalorder %s87, %s90
      %p96 = scmp.eq.s32.totalorder %s11, 0
      %p97 = por %p95, %p96
      %p98 = scmp.ne.s32.totalorder %s87, %s90
      %p99 = scmp.eq.s32.totalorder %s16, 1
      %p100 = por %p98, %p99
      %p101 = scmp.ne.s32.totalorder %s90, %s91
      %p102 = scmp.eq.s32.totalorder %s16, 0
      %p103 = por %p101, %p102
      %p104 = scmp.ne.s32.totalorder %s90, %s91
      %p105 = scmp.eq.s32.totalorder %s17, 1
      %p106 = por %p104, %p105
      %p108 = scmp.ne.s32.totalorder %s91, %s107
      %p109 = scmp.eq.s32.totalorder %s17, 0
      %p110 = por %p108, %p109
      %p111 = scmp.le.s32.totalorder 1, %s11
      %p112 = scmp.lt.s32.totalorder %s11, 3
      %p113 = pnand %p111, %p112
      %p114 = pneg %p113
      // Predicated region
      $region9: #{tpu_custom_call.1} parent=5 // pred_check
        _
      $region10: #{tpu_custom_call.1} parent=5 // pred_check_branch
        %116 = sbr.rel (%p113) target = $region12
      $region11: #{tpu_custom_call.1} parent=5 // pred_region
        %s117 = ssub.s32 %s11, 1
      $region12: #{tpu_custom_call.1} parent=5 // pred_fallthru
        _
      %p118 = scmp.lt.s32.totalorder %s11, 2
      // Predicated region
      $region13: #{tpu_custom_call.1} parent=5 // pred_check
        %p119 = pneg %p118
      $region14: #{tpu_custom_call.1} parent=5 // pred_check_branch
        %121 = sbr.rel (%p119) target = $region16
      $region15: #{tpu_custom_call.1} parent=5 // pred_region
        // Predicated region
        $region17: #{tpu_custom_call.1} parent=15 // pred_check
          %p122 = pneg %p45
        $region18: #{tpu_custom_call.1} parent=15 // pred_check_branch
          %124 = sbr.rel (%p122) target = $region20
        $region19: #{tpu_custom_call.1} parent=15 // pred_region
          %p125 = scmp.lt.s32.totalorder %s18, 1
          %s126 = scalar_select %p125, %s18, 1
          %p127 = scmp.lt.s32.totalorder %s19, 0
          %s128 = scalar_select %p127, %s19, 0
          %s129 = sadd.s32 %s128, %s126
          %s130 = smul.addr %s129, 8
          %s131 = scalar_lea.vmem %s0, %s130
        $region20: #{tpu_custom_call.1} parent=15 // pred_fallthru
          _
        // Predicated region
        $region21: #{tpu_custom_call.1} parent=15 // pred_check
          %p132 = pneg %p71
        $region22: #{tpu_custom_call.1} parent=15 // pred_check_branch
          %134 = sbr.rel (%p132) target = $region24
        $region23: #{tpu_custom_call.1} parent=15 // pred_region
          %p135 = scmp.lt.s32.totalorder %s18, 1
          %s136 = scalar_select %p135, %s18, 1
          %s137 = smul.addr %s136, 8
          %s138 = scalar_lea.vmem %s1, %s137
        $region24: #{tpu_custom_call.1} parent=15 // pred_fallthru
          _
      $region16: #{tpu_custom_call.1} parent=5 // pred_fallthru
        _
      %p139 = scmp.le.s32.totalorder 1, %s11
      %p140 = scmp.lt.s32.totalorder %s11, 3
      %p141 = pnand %p139, %p140
      %p142 = pneg %p141
      // Predicated region
      $region25: #{tpu_custom_call.1} parent=5 // pred_check
        _
      $region26: #{tpu_custom_call.1} parent=5 // pred_check_branch
        %144 = sbr.rel (%p141) target = $region28
      $region27: #{tpu_custom_call.1} parent=5 // pred_region
        %s145 = ssub.s32 %s11, 1
        %p146 = scmp.lt.s32.totalorder %s20, 1
        %s147 = scalar_select %p146, %s20, 1
        %p148 = scmp.lt.s32.totalorder %s21, 0
        %s149 = scalar_select %p148, %s21, 0
        %s150 = sadd.s32 %s149, %s147
        %s151 = smul.addr %s150, 8
        %s152 = scalar_lea.vmem %s0, %s151
        %p153 = pneg %p51
        %p154 = pneg %p48
        %p155 = scmp.lt.s32.totalorder %s20, 1
        %s156 = scalar_select %p155, %s20, 1
        %s157 = smul.addr %s156, 8
        %s158 = scalar_lea.vmem %s1, %s157
        %p159 = pneg %p77
        %p160 = pneg %p74
        %p161 = pneg %p103
        %p162 = pneg %p100
        %s163 = sand.u32 %s90, 1
        %s164 = scalar_lea.sflag [#allocation6], %s163
        %s165 = sand.u32 %s90, 1
        %s166 = smul.addr %s165, 8
        %s167 = scalar_lea.vmem [#allocation5], %s166
        %p168 = scmp.lt.s32.totalorder %s20, 1
        %s169 = scalar_select %p168, %s20, 1
        %p170 = scmp.lt.s32.totalorder %s21, 0
        %s171 = scalar_select %p170, %s21, 0
        %s172 = sadd.s32 %s171, %s169
        %s173 = smul.addr %s172, 8
        %s174 = scalar_lea.vmem %s0, %s173
        %p175 = scmp.lt.s32.totalorder %s20, 1
        %s176 = scalar_select %p175, %s20, 1
        %s177 = smul.addr %s176, 8
        %s178 = scalar_lea.vmem %s1, %s177
        %p179 = scmp.eq.s32.totalorder %s21, 0
        // Predicated region
        $region29: #{tpu_custom_call.1} parent=27 // pred_check
          %p180 = pneg %p179
        $region30: #{tpu_custom_call.1} parent=27 // pred_check_branch
          %182 = sbr.rel (%p180) target = $region32
        $region31: #{tpu_custom_call.1} parent=27 // pred_region
          %vm183 = vcmask 7168
          %184 = vst.msk [vmem:[#allocation2] sm:$0xff] %vm183, -inf
          %185 = vst.msk [vmem:[#allocation3] sm:$0xff] %vm183, 0.0
          %186 = vst.msk [vmem:[#allocation4] sm:$0xff] %vm183, 0.0
        $region32: #{tpu_custom_call.1} parent=27 // pred_fallthru
          _
        %v187 = vld [vmem:[%s174] sm:$0xff]
        %v188 = vld [vmem:[%s178] sm:$0xff]
        %v189 = vlaneseq
        %v190 = vand.u32 %v189, 127
        %191 = vmax.xlane.f32.xlu0 %v187
        %v192 = vpop.xlane.xlu0 %191
        %v193 = vld [vmem:[#allocation2] sm:$0xff]
        %v194 = vmax.f32 %v193, %v192
        %v195 = vld [vmem:[#allocation3] sm:$0xff]
        %v196 = vsub.f32 %v193, %v194
        %v197 = vmul.f32 %v196, 1.442695
        %v198 = vpow.pop %v197
        %v199 = vmul.f32 %v195, %v198
        %201 = vset.pattern.permute.xlu0 0
        %202 = vperm.xlu0 %201, %v194
        %v203 = vpop.permute.xlu0 %202
        %v205 = vsub.f32 %v187, %v203
        %v206 = vmul.f32 %v205, 1.442695
        %v207 = vpow.pop %v206
        %208 = vadd.xlane.f32.xlu0 %v207
        %v209 = vpop.xlane.xlu0 %208
        %v210 = vadd.f32 %v199, %v209
        %vm211 = vcmask 7168
        %212 = vst.msk [vmem:[#allocation3] sm:$0xff] %vm211, %v210
        %213 = vst.msk [vmem:[#allocation2] sm:$0xff] %vm211, %v194
        %s214 = smul.u32 %s21, 128
        %v215 = vstv %s214
        %v216 = vsub.s32 %v188, %v215
        %v217 = vld [vmem:[#allocation4] sm:$0xff]
        %218 = vset.pattern.permute.xlu0 0
        %219 = vperm.xlu0 %218, %v216
        %v220 = vpop.permute.xlu0 %219
        %vm221 = vcmp.eq.s32.totalorder %v190, %v220
        %v222 = vsel %vm221, %v187, 0.0
        %223 = vadd.xlane.f32.xlu0 %v222
        %v224 = vpop.xlane.xlu0 %223
        %v225 = vadd.f32 %v217, %v224
        %226 = vst.msk [vmem:[#allocation4] sm:$0xff] %vm211, %v225
        // Predicated region
        $region33: #{tpu_custom_call.1} parent=27 // pred_check
          %p227 = pneg %p179
        $region34: #{tpu_custom_call.1} parent=27 // pred_check_branch
          %229 = sbr.rel (%p227) target = $region36
        $region35: #{tpu_custom_call.1} parent=27 // pred_region
          %vm230 = vcmp.ge.s32.totalorder %v188, 0
          %v231 = vld [vmem:[#allocation2] sm:$0xff]
          %v232 = vld [vmem:[#allocation3] sm:$0xff]
          %v233 = vlog2.pop %v232
          %v234 = vmul.f32 %v233, 0.6931472
          %v235 = vadd.f32 %v231, %v234
          %v236 = vld [vmem:[#allocation4] sm:$0xff]
          %v237 = vsub.f32 %v235, %v236
          %v238 = vsel %vm230, %v237, 0.0
          %v239 = vsel %vm211, %v238, 0.0
          %240 = vadd.xlane.f32.xlu0 %v239
          %v241 = vpop.xlane.xlu0 %240
          %v242 = vrot.slane %v241, 4
          %v243 = vadd.f32 %v241, %v242
          %v244 = vrot.slane %v243, 2
          %v245 = vadd.f32 %v243, %v244
          %v246 = vrot.slane %v245, 1
          %v247 = vadd.f32 %v245, %v246
          %s248 = vtos %v247
          %v249 = vstv %s248
          %250 = vst [vmem:[%s167] sm:$0xff] %v249
        $region36: #{tpu_custom_call.1} parent=27 // pred_fallthru
          _
        %s251 = sand.u32 %s90, 1
        %s252 = scalar_lea.sflag [#allocation6], %s251
        %s253 = sand.u32 %s90, 1
        %s254 = smul.addr %s253, 8
        %s255 = scalar_lea.vmem [#allocation5], %s254
        // Predicated region
        $region37: #{tpu_custom_call.1} parent=27 // pred_check
          %p256 = pneg %p100
        $region38: #{tpu_custom_call.1} parent=27 // pred_check_branch
          %258 = sbr.rel (%p256) target = $region40
        $region39: #{tpu_custom_call.1} parent=27 // pred_region
          %s260 = ssub.s32 128, 128
          %261 = vsyncadd %s252, %s260
          %s262 = smul.addr %s20, 128
          %s263 = scalar_lea.hbm %s2, %s262
          %s265 = sshll.u32 %s255, 4
          %s266 = int_to_ptr.vmem [resolvable:$true] %s265
          %268 = dma.vmem_to_hbm [thread:$0]  %s266, 128, %s263, %s252
        $region40: #{tpu_custom_call.1} parent=27 // pred_fallthru
          _
      $region28: #{tpu_custom_call.1} parent=5 // pred_fallthru
        _
      %p269 = scmp.le.s32.totalorder 2, %s11
      // Predicated region
      $region41: #{tpu_custom_call.1} parent=5 // pred_check
        %p270 = pneg %p269
      $region42: #{tpu_custom_call.1} parent=5 // pred_check_branch
        %272 = sbr.rel (%p270) target = $region44
      $region43: #{tpu_custom_call.1} parent=5 // pred_region
        %s273 = ssub.s32 %s11, 2
        // Predicated region
        $region45: #{tpu_custom_call.1} parent=43 // pred_check
          %p274 = pneg %p106
        $region46: #{tpu_custom_call.1} parent=43 // pred_check_branch
          %276 = sbr.rel (%p274) target = $region48
        $region47: #{tpu_custom_call.1} parent=43 // pred_region
          %s277 = sand.u32 %s91, 1
          %s278 = scalar_lea.sflag [#allocation6], %s277
          %s279 = sand.u32 %s91, 1
          %s280 = smul.addr %s279, 8
          %s281 = scalar_lea.vmem [#allocation5], %s280
          %282 = dma.done %s278, 128
        $region48: #{tpu_custom_call.1} parent=43 // pred_fallthru
          _
      $region44: #{tpu_custom_call.1} parent=5 // pred_fallthru
        _
    $region6: #{tpu_custom_call.1} parent=1 // loop_footer
      %s15 = sadd.s32 1, %s11
    $region7: #{tpu_custom_call.1} parent=1 // loop_footer_branch
      %10 = sbr.rel target = $region3
    $region8: #{tpu_custom_call.1} parent=1 // loop_exit
      _
    %283 = vsyncpa [#allocation6], 1
    %s284 = scalar_lea.sflag [#allocation6], 1
    %285 = vsyncpa %s284, 1

</llo_original>
